<compile_context>
chip_gen: v6e
topology: v6e:2x2x1
jax: 0.10.0
libtpu: 0.0.40
codegen_flags: <defaults>
</compile_context>

<pallas_src>
import functools

import jax
import jax.numpy as jnp
from jax.experimental import pallas as pl
from jax.experimental.pallas import tpu as pltpu

EPS = 1e-6


def _sublayer_connection_kernel(dropout_p,
                                seed_ref,     # SMEM scalar-prefetch, (1,) int32
                                x_ref,        # (tm, D)
                                params_ref,   # (3, D): gamma, beta, linear bias
                                w_ref,        # (D, D)
                                o_ref):       # (tm, D)
    x = x_ref[...].astype(jnp.float32)
    tm, d = x.shape

    p = params_ref[...]
    gamma = p[0:1, :]
    beta = p[1:2, :]
    bias = p[2:3, :]

    # ---- LayerNorm (torch semantics: unbiased std, eps added to std) ----
    mean = jnp.mean(x, axis=-1, keepdims=True)
    xc = x - mean
    var_unbiased = jnp.sum(xc * xc, axis=-1, keepdims=True) * (1.0 / (d - 1))
    std = jnp.sqrt(var_unbiased)
    inv_std = 1.0 / (std + EPS)            # (tm, 1): one divide per row, exact torch parity
    normed = gamma * (xc * inv_std) + beta

    # ---- Sublayer: Linear(size -> size) on the MXU ----
    y = jnp.dot(normed, w_ref[...], preferred_element_type=jnp.float32) + bias

    # ---- Dropout (training mode, inverted scaling), integer-domain mask ----
    if dropout_p > 0.0:
        # Counter-based bits: hash of (global_row, col, seed).  Tile-size
        # independent and order-free -> "parallel" grid semantics are legal.
        gr = (jax.lax.broadcasted_iota(jnp.int32, (tm, d), 0)
              + pl.program_id(0) * tm).astype(jnp.uint32)
        gc = jax.lax.broadcasted_iota(jnp.int32, (tm, d), 1).astype(jnp.uint32)
        h = gr * jnp.uint32(0x9E3779B9) + gc + seed_ref[0].astype(jnp.uint32)
        # murmur3 fmix32 finalizer (decorrelates the structured input)
        h = h ^ (h >> 16)
        h = h * jnp.uint32(0x85EBCA6B)
        h = h ^ (h >> 13)
        h = h * jnp.uint32(0xC2B2AE35)
        h = h ^ (h >> 16)
        threshold = jnp.uint32(min(int(round(dropout_p * 4294967296.0)), 0xFFFFFFFF))
        keep = h >= threshold
        y = jnp.where(keep, y * jnp.float32(1.0 / (1.0 - dropout_p)),
                      jnp.float32(0.0))

    # ---- Residual add ----
    o_ref[...] = (x + y).astype(o_ref.dtype)


def sublayer_connection(x, gamma, beta, w, b, *, dropout_p=0.1, seed=0, tm=256):
    """x: (B, S, D) float32.  Returns (B, S, D)."""
    assert 0.0 <= dropout_p < 1.0, "dropout_p must be in [0, 1)"
    B, S, D = x.shape
    T = B * S

    # Token tile: as large as requested (default 256 rows), clamped to T and
    # rounded down to a multiple of 8 sublanes (f32).  T is zero-padded to a
    # multiple of the tile; padded rows are sliced off afterwards (they stay
    # finite: std=0 -> divide by eps only).
    tm_eff = max(8, min(int(tm), T))
    tm_eff = (tm_eff // 8) * 8
    t_pad = ((T + tm_eff - 1) // tm_eff) * tm_eff

    x2 = x.reshape(T, D)
    if t_pad != T:
        x2 = jnp.pad(x2, ((0, t_pad - T), (0, 0)))

    # Fuse the three constant (D,) vectors into one (3, D) operand.
    params = jnp.stack([gamma, beta, b]).astype(jnp.float32)
    seed_arr = jnp.array([seed], dtype=jnp.int32)

    kernel = functools.partial(_sublayer_connection_kernel, float(dropout_p))

    out = pl.pallas_call(
        kernel,
        out_shape=jax.ShapeDtypeStruct((t_pad, D), x.dtype),
        grid_spec=pltpu.PrefetchScalarGridSpec(
            num_scalar_prefetch=1,
            grid=(t_pad // tm_eff,),
            in_specs=[
                pl.BlockSpec((tm_eff, D), lambda i, seed: (i, 0)),  # x tile
                pl.BlockSpec((3, D), lambda i, seed: (0, 0)),       # gamma/beta/bias
                pl.BlockSpec((D, D), lambda i, seed: (0, 0)),       # W (resident)
            ],
            out_specs=pl.BlockSpec((tm_eff, D), lambda i, seed: (i, 0)),
        ),
        compiler_params=pltpu.CompilerParams(
            # Tiles are fully independent (counter-based dropout mask), so the
            # grid may shard across TensorCores (2x on v7x, neutral elsewhere).
            dimension_semantics=("parallel",)),
    )(seed_arr, x2, params, w)

    if t_pad != T:
        out = out[:T]
    return out.reshape(B, S, D)


def _reference_no_dropout(x, gamma, beta, w, b):
    d = x.shape[-1]
    mean = jnp.mean(x, axis=-1, keepdims=True)
    xc = x - mean
    var = jnp.sum(xc * xc, axis=-1, keepdims=True) / (d - 1)
    std = jnp.sqrt(var)
    normed = gamma * xc / (std + EPS) + beta
    y = normed @ w + b
    return x + y


if __name__ == "__main__":
    # Small shapes implied by the module: batch=2, seq=8, hidden size=32.
    B, S, D = 2, 8, 32
    key = jax.random.PRNGKey(0)
    kx, kw = jax.random.split(key)

    x = jax.random.normal(kx, (B, S, D), dtype=jnp.float32)

    # LayerNorm params exactly as in __init__: a_2 = ones, b_2 = zeros.
    gamma = jnp.ones((D,), dtype=jnp.float32)
    beta = jnp.zeros((D,), dtype=jnp.float32)

    # Deterministic synthetic sublayer (Linear size->size); bias zeros.
    w = jax.random.normal(kw, (D, D), dtype=jnp.float32) * (1.0 / jnp.sqrt(D))
    b = jnp.zeros((D,), dtype=jnp.float32)

    # Correctness check of the deterministic path (dropout disabled).
    out0 = sublayer_connection(x, gamma, beta, w, b, dropout_p=0.0, seed=0)
    ref0 = _reference_no_dropout(x, gamma, beta, w, b)
    jax.block_until_ready(out0)
    assert out0.shape == (B, S, D)
    assert bool(jnp.allclose(out0, ref0, atol=1e-4, rtol=1e-4))

    # Training-mode run with dropout.
    out = sublayer_connection(x, gamma, beta, w, b, dropout_p=0.1, seed=0)
    jax.block_until_ready(out)
    assert out.shape == (B, S, D)
    assert bool(jnp.all(jnp.isfinite(out)))
    print("KERNEL_OK")
</pallas_src>

<mosaic_0001>
module attributes {stable_mosaic.version = 11 : i64} {
  func.func @_sublayer_connection_kernel(%arg0: i32, %arg1: memref<1xi32, #tpu.memory_space<smem>>, %arg2: memref<16x32xf32, #tpu.memory_space<vmem>>, %arg3: memref<3x32xf32, #tpu.memory_space<vmem>>, %arg4: memref<32x32xf32, #tpu.memory_space<vmem>>, %arg5: memref<16x32xf32, #tpu.memory_space<vmem>>) attributes {dimension_semantics = [#tpu.dimension_semantics<parallel>], iteration_bounds = array<i64: 1>, scalar_prefetch = 1 : i64, scratch_operands = 0 : i64, tpu.core_type = #tpu.core_type<tc>, window_params = [{transform_indices = @transform_0, window_bounds = array<i64: 16, 32>}, {pipeline_mode = #tpu.pipeline_mode<synchronous>, transform_indices = @transform_1, window_bounds = array<i64: 3, 32>}, {pipeline_mode = #tpu.pipeline_mode<synchronous>, transform_indices = @transform_2, window_bounds = array<i64: 32, 32>}, {transform_indices = @transform_3, window_bounds = array<i64: 16, 32>}]} {
    %c0 = arith.constant 0 : index
    %c0_0 = arith.constant 0 : index
    %0 = vector.load %arg2[%c0, %c0_0] : memref<16x32xf32, #tpu.memory_space<vmem>>, vector<16x32xf32>
    %c0_1 = arith.constant 0 : index
    %c0_2 = arith.constant 0 : index
    %1 = vector.load %arg3[%c0_1, %c0_2] : memref<3x32xf32, #tpu.memory_space<vmem>>, vector<3x32xf32>
    %2 = vector.extract_strided_slice %1 {offsets = [0, 0], sizes = [1, 32], strides = [1, 1]} : vector<3x32xf32> to vector<1x32xf32>
    %3 = vector.extract_strided_slice %1 {offsets = [1, 0], sizes = [1, 32], strides = [1, 1]} : vector<3x32xf32> to vector<1x32xf32>
    %4 = vector.extract_strided_slice %1 {offsets = [2, 0], sizes = [1, 32], strides = [1, 1]} : vector<3x32xf32> to vector<1x32xf32>
    %cst = arith.constant dense<0.000000e+00> : vector<16xf32>
    %5 = vector.multi_reduction <add>, %0, %cst [1] : vector<16x32xf32> to vector<16xf32>
    %6 = vector.shape_cast %5 : vector<16xf32> to vector<16x1xf32>
    %cst_3 = arith.constant 3.200000e+01 : f32
    %7 = vector.broadcast %cst_3 : f32 to vector<16x1xf32>
    %8 = arith.divf %6, %7 : vector<16x1xf32>
    %9 = vector.broadcast %8 : vector<16x1xf32> to vector<16x32xf32>
    %10 = arith.subf %0, %9 : vector<16x32xf32>
    %11 = arith.mulf %10, %10 : vector<16x32xf32>
    %cst_4 = arith.constant dense<0.000000e+00> : vector<16xf32>
    %12 = vector.multi_reduction <add>, %11, %cst_4 [1] : vector<16x32xf32> to vector<16xf32>
    %13 = vector.shape_cast %12 : vector<16xf32> to vector<16x1xf32>
    %cst_5 = arith.constant 0.0322580636 : f32
    %14 = vector.broadcast %cst_5 : f32 to vector<16x1xf32>
    %15 = arith.mulf %13, %14 : vector<16x1xf32>
    %16 = math.sqrt %15 : vector<16x1xf32>
    %cst_6 = arith.constant 9.99999997E-7 : f32
    %17 = vector.broadcast %cst_6 : f32 to vector<16x1xf32>
    %18 = arith.addf %16, %17 : vector<16x1xf32>
    %cst_7 = arith.constant 1.000000e+00 : f32
    %19 = vector.broadcast %cst_7 : f32 to vector<16x1xf32>
    %20 = arith.divf %19, %18 : vector<16x1xf32>
    %21 = vector.broadcast %20 : vector<16x1xf32> to vector<16x32xf32>
    %22 = arith.mulf %10, %21 : vector<16x32xf32>
    %23 = vector.broadcast %2 : vector<1x32xf32> to vector<16x32xf32>
    %24 = arith.mulf %23, %22 : vector<16x32xf32>
    %25 = vector.broadcast %3 : vector<1x32xf32> to vector<16x32xf32>
    %26 = arith.addf %24, %25 : vector<16x32xf32>
    %c0_8 = arith.constant 0 : index
    %c0_9 = arith.constant 0 : index
    %27 = vector.load %arg4[%c0_8, %c0_9] : memref<32x32xf32, #tpu.memory_space<vmem>>, vector<32x32xf32>
    %cst_10 = arith.constant dense<0.000000e+00> : vector<16x32xf32>
    %28 = tpu.matmul %26, %27, %cst_10 {dimension_numbers = #tpu.dot_dimension_numbers<[1], [0], [0], [1], [0, 0, 1, 1], [], []>} : vector<16x32xf32>, vector<32x32xf32>, vector<16x32xf32> -> vector<16x32xf32>
    %29 = vector.broadcast %4 : vector<1x32xf32> to vector<16x32xf32>
    %30 = arith.addf %28, %29 : vector<16x32xf32>
    %31 = arith.addf %0, %30 : vector<16x32xf32>
    %c0_11 = arith.constant 0 : index
    %c0_12 = arith.constant 0 : index
    %32 = vector.load %arg5[%c0_11, %c0_12] : memref<16x32xf32, #tpu.memory_space<vmem>>, vector<16x32xf32>
    tpu.vector_store %arg5[%c0_11, %c0_12], %31 {strides = array<i32>} : memref<16x32xf32, #tpu.memory_space<vmem>>, vector<16x32xf32>,
    return
  }
  func.func @transform_0(%arg0: i32, %arg1: memref<1xi32, #tpu.memory_space<smem>>) -> (i32, i32) {
    %c0_i32 = arith.constant 0 : i32
    %c0_i32_0 = arith.constant 0 : i32
    return %arg0, %c0_i32 : i32, i32
  }
  func.func @transform_1(%arg0: i32, %arg1: memref<1xi32, #tpu.memory_space<smem>>) -> (i32, i32) {
    %c0_i32 = arith.constant 0 : i32
    %c0_i32_0 = arith.constant 0 : i32
    %c0_i32_1 = arith.constant 0 : i32
    return %c0_i32, %c0_i32_0 : i32, i32
  }
  func.func @transform_2(%arg0: i32, %arg1: memref<1xi32, #tpu.memory_space<smem>>) -> (i32, i32) {
    %c0_i32 = arith.constant 0 : i32
    %c0_i32_0 = arith.constant 0 : i32
    %c0_i32_1 = arith.constant 0 : i32
    return %c0_i32, %c0_i32_0 : i32, i32
  }
  func.func @transform_3(%arg0: i32, %arg1: memref<1xi32, #tpu.memory_space<smem>>) -> (i32, i32) {
    %c0_i32 = arith.constant 0 : i32
    %c0_i32_0 = arith.constant 0 : i32
    return %arg0, %c0_i32 : i32, i32
  }
}

</mosaic_0001>

<llo_original>
// kernel: tpu_custom_call.1
$region0: #{tpu_custom_call.1}
  #allocation0 [shape = 'u32[]', space=smem, size = 0x4, offset = 0x4, fixed_abs, tag = 'smem constant byte address 0x4 - core index']
  #allocation1 [shape = 'u32[144,128]{1,0:T(1,128)}', space=vmem, size = 0x12000, scoped, tag = 'internal scratch']
  #allocation2 [shape = 's32[1]{0}', space=sflag, size = 0x4, scoped, tag = 'scoped memory for tpu_custom_call.1']
  #allocation3 [shape = 's32[1]{0:T(128)S(6)}', space=smem, size = 0x200, scoped, tag = 'prefetched SMEM operand 0']
  %s0 = inlined_call_operand.<no memory space> [shape: s32[1], index: 0, kind: input, shape index: {}]
  %s1 = inlined_call_operand.hbm [shape: f32[16,32], index: 1, kind: input, shape index: {}]
  %s2 = inlined_call_operand.hbm [shape: f32[3,32], index: 2, kind: input, shape index: {}]
  %s3 = inlined_call_operand.hbm [shape: f32[32,32], index: 3, kind: input, shape index: {}]
  %s4 = inlined_call_operand.hbm [shape: f32[16,32], index: 4, kind: output, shape index: {}]
  %s5 = sld [smem:[#allocation0]]
  $region34: #{tpu_custom_call.1} parent=0
    _
  %s7 = ssub.s32 1, %s5
  %s8 = scalar_select 0, %s7, %s5
  %9 = sst [smem:[#allocation3]] %s0
  $region1: #{tpu_custom_call.1} parent=0
    #allocation4 [shape = 'u8[8192]{0}', space=vmem, size = 0x2000, scoped, tag = 'input window, operand 1, single buffered']
    #allocation5 [shape = 's32[1]{0}', space=sflag, size = 0x4, scoped, tag = 'scoped memory for tpu_custom_call.1']
    #allocation6 [shape = 's32[1]{0}', space=sflag, size = 0x4, scoped, tag = 'scoped memory for tpu_custom_call.1']
    #allocation7 [shape = 'u8[2048]{0}', space=vmem, size = 0x800, scoped, tag = 'input window, operand 2, single buffered']
    #allocation8 [shape = 's32[1]{0}', space=sflag, size = 0x4, scoped, tag = 'scoped memory for tpu_custom_call.1']
    #allocation9 [shape = 'u8[16384]{0}', space=vmem, size = 0x4000, scoped, tag = 'input window, operand 3, single buffered']
    #allocation10 [shape = 'u8[8192]{0}', space=vmem, size = 0x2000, scoped, tag = 'output window, operand 0, single buffered']
    %10 = vsyncpa [#allocation5], 0
    %11 = vsyncpa [#allocation8], 0
    %12 = vsyncpa [#allocation6], 0
    // Predicated region
    $region2: #{tpu_custom_call.1} parent=1 // pred_check
      _
    $region3: #{tpu_custom_call.1} parent=1 // pred_check_branch
      %14 = sbr.rel (0) target = $region5
    $region4: #{tpu_custom_call.1} parent=1 // pred_region
      %s16 = ssub.s32 256, 256
      %17 = vsyncadd [#allocation5], %s16
      %s18 = sshll.u32 [#allocation4], 4
      %s19 = int_to_ptr.vmem [resolvable:$true] %s18
      %24 = dma.hbm_to_vmem [thread:$0]  %s1, 256, %s19, [#allocation5], 128, 128, 8
    $region5: #{tpu_custom_call.1} parent=1 // pred_fallthru
      _
    // Predicated region
    $region6: #{tpu_custom_call.1} parent=1 // pred_check
      _
    $region7: #{tpu_custom_call.1} parent=1 // pred_check_branch
      %26 = sbr.rel (0) target = $region9
    $region8: #{tpu_custom_call.1} parent=1 // pred_region
      %s28 = ssub.s32 64, 64
      %29 = vsyncadd [#allocation8], %s28
      %s31 = sshll.u32 [#allocation7], 4
      %s32 = int_to_ptr.vmem [resolvable:$true] %s31
      %34 = dma.hbm_to_vmem [thread:$0]  %s2, 64, %s32, [#allocation8]
    $region9: #{tpu_custom_call.1} parent=1 // pred_fallthru
      _
    // Predicated region
    $region10: #{tpu_custom_call.1} parent=1 // pred_check
      _
    $region11: #{tpu_custom_call.1} parent=1 // pred_check_branch
      %36 = sbr.rel (0) target = $region13
    $region12: #{tpu_custom_call.1} parent=1 // pred_region
      %s38 = ssub.s32 512, 512
      %39 = vsyncadd [#allocation8], %s38
      %s40 = sshll.u32 [#allocation9], 4
      %s41 = int_to_ptr.vmem [resolvable:$true] %s40
      %46 = dma.hbm_to_vmem [thread:$0]  %s3, 512, %s41, [#allocation8], 128, 128, 8
    $region13: #{tpu_custom_call.1} parent=1 // pred_fallthru
      _
    // Predicated region
    $region14: #{tpu_custom_call.1} parent=1 // pred_check
      _
    $region15: #{tpu_custom_call.1} parent=1 // pred_check_branch
      %48 = sbr.rel (0) target = $region17
    $region16: #{tpu_custom_call.1} parent=1 // pred_region
      %49 = dma.done [#allocation5], 256
    $region17: #{tpu_custom_call.1} parent=1 // pred_fallthru
      _
    // Predicated region
    $region18: #{tpu_custom_call.1} parent=1 // pred_check
      _
    $region19: #{tpu_custom_call.1} parent=1 // pred_check_branch
      %51 = sbr.rel (0) target = $region21
    $region20: #{tpu_custom_call.1} parent=1 // pred_region
      %52 = dma.done [#allocation8], 64
    $region21: #{tpu_custom_call.1} parent=1 // pred_fallthru
      _
    // Predicated region
    $region22: #{tpu_custom_call.1} parent=1 // pred_check
      _
    $region23: #{tpu_custom_call.1} parent=1 // pred_check_branch
      %54 = sbr.rel (0) target = $region25
    $region24: #{tpu_custom_call.1} parent=1 // pred_region
      %55 = dma.done [#allocation8], 512
    $region25: #{tpu_custom_call.1} parent=1 // pred_fallthru
      _
    %v56 = vld [vmem:[#allocation4] sm:$0xff]
    %v57 = vld [vmem:[#allocation4 + $0x8] sm:$0xff]
    %v58 = vld [vmem:[#allocation7] sm:$0x7]
    %vm59 = vcmask 261120
    %v60 = vsel %vm59, %v56, 0.0
    %61 = vadd.xlane.f32.xlu0 %v60
    %v62 = vpop.xlane.xlu0 %61
    %v63 = vsel %vm59, %v57, 0.0
    %64 = vadd.xlane.f32.xlu0 %v63
    %v65 = vpop.xlane.xlu0 %64
    %v66 = vrcp.pop 32.0
    %v67 = vmul.f32 %v62, %v66
    %v68 = vmul.f32 %v65, %v66
    %v69 = vsub.f32 %v56, %v67
    %v70 = vsub.f32 %v57, %v68
    %v71 = vmul.f32 %v69, %v69
    %v72 = vmul.f32 %v70, %v70
    %v73 = vsel %vm59, %v71, 0.0
    %74 = vadd.xlane.f32.xlu0 %v73
    %v75 = vpop.xlane.xlu0 %74
    %v76 = vsel %vm59, %v72, 0.0
    %77 = vadd.xlane.f32.xlu0 %v76
    %v78 = vpop.xlane.xlu0 %77
    %v79 = vmul.f32 %v75, 0.032258064
    %v80 = vmul.f32 %v78, 0.032258064
    %v81 = vrsqrt.pop %v79
    %v82 = vmul.f32 %v79, %v81
    %vm83 = vcmp.eq.f32.partialorder %v79, inf
    %v84 = vsel %vm83, %v79, %v82
    %vm85 = vcmp.eq.f32.partialorder %v79, 0.0
    %v86 = vand.u32 %v79, 2147483648
    %v87 = vsel %vm85, %v86, %v84
    %v88 = vrsqrt.pop %v80
    %v89 = vmul.f32 %v80, %v88
    %vm90 = vcmp.eq.f32.partialorder %v80, inf
    %v91 = vsel %vm90, %v80, %v89
    %vm92 = vcmp.eq.f32.partialorder %v80, 0.0
    %v93 = vand.u32 %v80, 2147483648
    %v94 = vsel %vm92, %v93, %v91
    %v95 = vadd.f32 %v87, 1e-06
    %v96 = vadd.f32 %v94, 1e-06
    %v97 = vrcp.pop %v95
    %v98 = vmul.f32 1.0, %v97
    %v99 = vrcp.pop %v96
    %v100 = vmul.f32 1.0, %v99
    %v101 = vmul.f32 %v69, %v98
    %v102 = vmul.f32 %v70, %v100
    %v103 = vlaneseq
    %v104 = vshrl.u32 %v103, 7
    %v105 = vsub.s32 0, %v104
    %v106 = vrot.slane %v58, %v105
    %v107 = vmul.f32 %v106, %v101
    %v108 = vmul.f32 %v106, %v102
    %v109 = vlaneseq
    %v110 = vshrl.u32 %v109, 7
    %v111 = vsub.s32 1, %v110
    %v112 = vrot.slane %v58, %v111
    %v113 = vadd.f32 %v107, %v112
    %v114 = vadd.f32 %v108, %v112
    %v115 = vld [vmem:[#allocation9] sm:$0xff]
    %v116 = vld [vmem:[#allocation9 + $0x8] sm:$0xff]
    %v117 = vld [vmem:[#allocation9 + $0x10] sm:$0xff]
    %v118 = vld [vmem:[#allocation9 + $0x18] sm:$0xff]
    %v119 = vlaneseq
    %v120 = vshrl.u32 %v119, 7
    %v121 = vsub.s32 2, %v120
    %v122 = vrot.slane %v58, %v121
    %v124 = vsel %vm59, %v113, 0
    %v127 = vsel %vm59, %v114, 0
    %129 = vmatprep.subr.mxu0 0.0
    %130 = vmatpush1.msra.mxu0 0.0
    %131 = vmatprep.subr.mxu0 0.0
    %132 = vmatpush1.msra.mxu0 0.0
    %133 = vmatprep.subr.mxu0 0.0
    %134 = vmatpush1.msra.mxu0 0.0
    %135 = vmatprep.subr.mxu0 0.0
    %136 = vmatpush1.msra.mxu0 0.0
    %137 = vmatprep.subr.mxu0 0.0
    %138 = vmatpush1.msra.mxu0 0.0
    %139 = vmatprep.subr.mxu0 0.0
    %140 = vmatpush1.msra.mxu0 0.0
    %141 = vmatprep.subr.mxu0 0.0
    %142 = vmatpush1.msra.mxu0 0.0
    %143 = vmatprep.subr.mxu0 0.0
    %144 = vmatpush1.msra.mxu0 0.0
    %145 = vmatprep.subr.mxu0 0.0
    %146 = vmatpush1.msra.mxu0 0.0
    %147 = vmatprep.subr.mxu0 0.0
    %148 = vmatpush1.msra.mxu0 0.0
    %149 = vmatprep.subr.mxu0 0.0
    %150 = vmatpush1.msra.mxu0 0.0
    %151 = vmatprep.subr.mxu0 0.0
    %152 = vmatpush1.msra.mxu0 0.0
    %153 = vmatprep.subr.mxu0 0.0
    %154 = vmatpush1.msra.mxu0 %v118
    %155 = vmatprep.subr.mxu0 0.0
    %156 = vmatpush1.msra.mxu0 %v117
    %157 = vmatprep.subr.mxu0 0.0
    %158 = vmatpush1.msra.mxu0 %v116
    %159 = vmatprep.subr.mxu0 0.0
    %160 = vmatpush1.msra.mxu0 %v115
    %161 = vmatprep.subr.mxu0 0.0
    %162 = vmatpush2.msra.mxu0 0.0
    %163 = vmatprep.subr.mxu0 0.0
    %164 = vmatpush2.msra.mxu0 0.0
    %165 = vmatprep.subr.mxu0 0.0
    %166 = vmatpush2.msra.mxu0 0.0
    %167 = vmatprep.subr.mxu0 0.0
    %168 = vmatpush2.msra.mxu0 0.0
    %169 = vmatprep.subr.mxu0 0.0
    %170 = vmatpush2.msra.mxu0 0.0
    %171 = vmatprep.subr.mxu0 0.0
    %172 = vmatpush2.msra.mxu0 0.0
    %173 = vmatprep.subr.mxu0 0.0
    %174 = vmatpush2.msra.mxu0 0.0
    %175 = vmatprep.subr.mxu0 0.0
    %176 = vmatpush2.msra.mxu0 0.0
    %177 = vmatprep.subr.mxu0 0.0
    %178 = vmatpush2.msra.mxu0 0.0
    %179 = vmatprep.subr.mxu0 0.0
    %180 = vmatpush2.msra.mxu0 0.0
    %181 = vmatprep.subr.mxu0 0.0
    %182 = vmatpush2.msra.mxu0 0.0
    %183 = vmatprep.subr.mxu0 0.0
    %184 = vmatpush2.msra.mxu0 0.0
    %185 = vmatprep.subr.mxu0 0.0
    %186 = vmatpush2.msra.mxu0 0.0
    %187 = vmatprep.subr.mxu0 0.0
    %188 = vmatpush2.msra.mxu0 0.0
    %189 = vmatprep.subr.mxu0 0.0
    %190 = vmatpush2.msra.mxu0 0.0
    %191 = vmatprep.subr.mxu0 0.0
    %192 = vmatpush2.msra.mxu0 0.0
    %193 = vmatprep.mubr.f32.mxu0 0.0
    %194 = vmatmul.mubr.f32.gmra.mxu0 %v124
    %v195 = vpop.f32.mrf.mxu0
    %v196 = vadd.f32 %v122, %v195
    %v197 = vpop.f32.mrf.mxu0
    %198 = vmatprep.mubr.f32.mxu0 0.0
    %199 = vmatmul.mubr.f32.gmra.mxu0 %v127
    %v200 = vpop.f32.mrf.mxu0
    %v201 = vadd.f32 %v122, %v200
    %v202 = vpop.f32.mrf.mxu0
    %203 = vdwg.mxu0
    %v204 = vadd.f32 %v56, %v196
    %v205 = vadd.f32 %v57, %v201
    %206 = vst.msk [vmem:[#allocation10] sm:$0xff] %vm59, %v204
    %207 = vst.msk [vmem:[#allocation10 + $0x8] sm:$0xff] %vm59, %v205
    // Predicated region
    $region26: #{tpu_custom_call.1} parent=1 // pred_check
      _
    $region27: #{tpu_custom_call.1} parent=1 // pred_check_branch
      %209 = sbr.rel (0) target = $region29
    $region28: #{tpu_custom_call.1} parent=1 // pred_region
      %s211 = ssub.s32 256, 256
      %212 = vsyncadd [#allocation6], %s211
      %s213 = sshll.u32 [#allocation10], 4
      %s214 = int_to_ptr.vmem [resolvable:$true] %s213
      %219 = dma.vmem_to_hbm [thread:$0]  %s214, 256, %s4, [#allocation6], 128, 128, 8
    $region29: #{tpu_custom_call.1} parent=1 // pred_fallthru
      _
    // Predicated region
    $region30: #{tpu_custom_call.1} parent=1 // pred_check
      _
    $region31: #{tpu_custom_call.1} parent=1 // pred_check_branch
      %221 = sbr.rel (0) target = $region33
    $region32: #{tpu_custom_call.1} parent=1 // pred_region
      %222 = dma.done [#allocation6], 256
    $region33: #{tpu_custom_call.1} parent=1 // pred_fallthru
      _
    %223 = vsyncpa [#allocation5], 1
    %224 = vsyncpa [#allocation8], 1
    %225 = vsyncpa [#allocation6], 1

</llo_original>
